<compile_context>
chip_gen: v7x
topology: tpu7x:2x2x1
jax: 0.10.0
libtpu: 0.0.40
codegen_flags: <defaults>
</compile_context>

<pallas_src>
from functools import partial

import jax
import jax.numpy as jnp
from jax.experimental import pallas as pl
from jax.experimental.pallas import tpu as pltpu


def _hbm_copy_kernel(x_hbm, o_hbm, sem):
    # Single HBM->HBM DMA; no VMEM round trip, no vector load/store work.
    cp = pltpu.make_async_copy(x_hbm, o_hbm, sem)
    cp.start()
    cp.wait()


@partial(jax.jit, static_argnames=("target_shape",))
def view_module(x, target_shape):
    """Reproduce M.forward: x.view(target_shape).

    x: (B, S, H) array. target_shape: (B, S, nh, hd) with nh * hd == H.
    """
    B, S, H = x.shape
    assert target_shape[0] == B and target_shape[1] == S
    assert target_shape[2] * target_shape[3] == H

    copied = pl.pallas_call(
        _hbm_copy_kernel,
        out_shape=jax.ShapeDtypeStruct(x.shape, x.dtype),
        # Leave both operands in place (HBM); the kernel only issues a DMA.
        in_specs=[pl.BlockSpec(memory_space=pl.ANY)],
        out_specs=pl.BlockSpec(memory_space=pl.ANY),
        scratch_shapes=[pltpu.SemaphoreType.DMA],
    )(x)

    # torch .view() semantics: contiguous row-major reinterpretation of shape
    # (metadata-only; the head split costs nothing).
    return jnp.reshape(copied, target_shape)


if __name__ == "__main__":
    key = jax.random.PRNGKey(0)
    # Shapes implied by the module: x241 is (1, 384, 256), x244 = (1, 384, 4, 64)
    x241 = jax.random.normal(key, (1, 384, 256), dtype=jnp.float32)
    x244 = (1, 384, 4, 64)

    out = view_module(x241, x244)
    out = jax.block_until_ready(out)

    # Correctness check against plain JAX reshape (== torch .view semantics).
    ref = jnp.reshape(x241, x244)
    assert out.shape == x244, f"bad shape {out.shape}"
    assert out.dtype == x241.dtype
    assert bool(jnp.array_equal(out, ref)), "mismatch vs reference reshape"

    print("KERNEL_OK")
</pallas_src>

<mosaic_0001>
module attributes {stable_mosaic.version = 11 : i64} {
  func.func @_hbm_copy_kernel(%arg0: memref<1x384x256xf32, #tpu.memory_space<any>>, %arg1: memref<1x384x256xf32, #tpu.memory_space<any>>, %arg2: memref<!tpu.dma_semaphore, #tpu.memory_space<semaphore_mem>>) attributes {dimension_semantics = [], scalar_prefetch = 0 : i64, scratch_operands = 1 : i64, tpu.core_type = #tpu.core_type<tc>} {
    tpu.enqueue_dma source(%arg0 : memref<1x384x256xf32, #tpu.memory_space<any>>) target(%arg1 : memref<1x384x256xf32, #tpu.memory_space<any>>) target_semaphore(%arg2 : memref<!tpu.dma_semaphore, #tpu.memory_space<semaphore_mem>>)
    tpu.wait_dma2 semaphore(%arg2 : memref<!tpu.dma_semaphore, #tpu.memory_space<semaphore_mem>>) src(%arg0 : memref<1x384x256xf32, #tpu.memory_space<any>>) dst(%arg1 : memref<1x384x256xf32, #tpu.memory_space<any>>)
    return
  }
}

</mosaic_0001>

<llo_original>
// kernel: view_module.1
$region0: #{view_module.1}
  #allocation0 [shape = 'u32[]', space=smem, size = 0x4, offset = 0x4, fixed_abs, tag = 'smem constant byte address 0x4 - core index']
  #allocation1 [shape = 'u32[144,128]{1,0:T(1,128)}', space=vmem, size = 0x12000, scoped, tag = 'internal scratch']
  #allocation2 [shape = 's32[1]{0}', space=sflag, size = 0x4, scoped, tag = 'scratch operand']
  #allocation3 [shape = 's32[]', space=sflag, size = 0x4, offset = 0, fixed_abs, tag = 'sflag constant byte address 0x0 - dummy sync flag']
  #allocation4 [shape = 's32[]', space=sflag, size = 0x4, offset = 0, fixed_abs, tag = 'sflag constant byte address 0x0 - dummy sync flag']
  #allocation5 [shape = 'u32[]', space=smem, size = 0x4, offset = 0x44, fixed_abs, tag = 'smem constant byte address 0x44 - assertion arg 0']
  #allocation6 [shape = 'u32[]', space=smem, size = 0x4, offset = 0x48, fixed_abs, tag = 'smem constant byte address 0x48 - assertion arg 1']
  %s0 = inlined_call_operand.hbm [shape: f32[1,384,256], index: 0, kind: input, shape index: {}]
  %s1 = inlined_call_operand.vmem [shape: f32[1,384,256], index: 1, kind: output, shape index: {}]
  %s2 = sld [smem:[#allocation0]]
  $region6: #{view_module.1} parent=0
    _
  %s4 = ssub.s32 1, %s2
  %s5 = scalar_select 0, %s4, %s2
  // Predicated region
  $region2: #{view_module.1} parent=0 // pred_check
    _
  $region3: #{view_module.1} parent=0 // pred_check_branch
    %7 = sbr.rel target = $region5
  $region4: #{view_module.1} parent=0 // pred_region
    %8 = sst [smem:[#allocation5]] [#allocation4]
    %9 = sst [smem:[#allocation6]] [#allocation3]
  $region5: #{view_module.1} parent=0 // pred_fallthru
    _
  %11 = shalt.err (0)
  %s13 = sshll.u32 %s1, 4
  %s14 = int_to_ptr.vmem [resolvable:$true] %s13
  %16 = dma.hbm_to_vmem [thread:$0]  %s0, 12288, %s14, [#allocation2]
  %s17 = smul.u32 8, 1
  %s18 = smul.u32 %s17, 48
  %s19 = smul.u32 %s18, 2
  %s20 = sshll.u32 %s19, 4
  %21 = dma.done [#allocation2], %s20
  %22 = vsyncmov [#allocation2]
  %s23 = vpop.sfrf %22
  %p24 = scmp.eq.s32.totalorder %s23, 0
  %p25 = pneg %p24
  %27 = shalt.err (%p25)

</llo_original>
